<compile_context>
chip_gen: v7x
topology: tpu7x:2x2x1
jax: 0.10.0
libtpu: 0.0.40
codegen_flags: <defaults>
</compile_context>

<pallas_src>
import functools

import jax
import jax.numpy as jnp
from jax.experimental import pallas as pl
from jax.experimental.pallas import tpu as pltpu

THRESHOLD = 1.0
RESET_VOLTAGE = 0.0


def _lif_kernel(x_ref, w_ref, out_ref, cur_ref, mem_ref, *, tt, b, unroll):
    # x_ref:   (tt*b, I)  bf16 spikes for this time chunk (time-major rows)
    # w_ref:   (I, to)    f32 weight tile for this O tile (auto-DMA'd, resident
    #                     across the time axis since its block index is o-only)
    # out_ref: (tt*b, to) f32 spikes emitted for this chunk / O tile
    # cur_ref: (tt*b, to) f32 VMEM scratch holding the chunk's input currents
    # mem_ref: (b, to)    f32 membrane potential, carried across time chunks
    c = pl.program_id(1)

    @pl.when(c == 0)
    def _():
        # New O tile (or very first chunk): reset the membrane.
        mem_ref[...] = jnp.zeros_like(mem_ref)

    # One MXU matmul for the whole chunk: (tt*b, I) @ (I, to) -> (tt*b, to).
    # x is exactly {0,1}; the bf16 -> f32 cast is lossless, accumulation is f32.
    cur_ref[...] = jnp.dot(
        x_ref[...].astype(jnp.float32), w_ref[...],
        preferred_element_type=jnp.float32)

    grp = unroll * b  # rows handled per fori_loop iteration

    def group_body(g, mem):
        base = pl.multiple_of(g * grp, grp)
        for u in range(unroll):
            off = pl.multiple_of(base + u * b, b)
            mem = mem + cur_ref[pl.ds(off, b), :]
            spiked = mem > THRESHOLD
            out_ref[pl.ds(off, b), :] = spiked.astype(out_ref.dtype)
            mem = jnp.where(spiked, RESET_VOLTAGE, mem)
        return mem

    mem_ref[...] = jax.lax.fori_loop(0, tt // unroll, group_body, mem_ref[...])


def _round_up(x, m):
    return -(-x // m) * m


def _choose_o_tile(o_pad, max_tile=512):
    """Largest multiple of 128 that divides o_pad and is <= max_tile."""
    to = max(128, min(o_pad, max_tile) // 128 * 128)
    while o_pad % to:
        to -= 128
    return to


def _choose_chunk(T, b_pad, i_size, o_tile, *, unroll=8, target_rows=1024,
                  vmem_budget_bytes=20 * 2**20):
    """Pick time steps per grid chunk: ~target_rows matmul rows, bounded by an
    explicit VMEM budget for the pipelined blocks + currents scratch."""
    per_step = b_pad * (2 * i_size * 2        # x block, bf16, double-buffered
                        + 2 * o_tile * 4      # out block, f32, double-buffered
                        + o_tile * 4)         # currents scratch, f32
    tt_budget = max(unroll, vmem_budget_bytes // per_step)
    tt_target = max(unroll, target_rows // b_pad)
    tt_needed = _round_up(T, unroll)
    tt = min(tt_budget, tt_target, tt_needed)
    tt = max(unroll, (tt // unroll) * unroll)  # multiple of the unroll factor
    t_pad = _round_up(T, tt)
    return tt, t_pad


def lif_neuron_layer(spike_input, weight):
    """spike_input: (B, I, T) float32 {0,1}; weight: (I, O) float32.
    Returns spike_output: (B, O, T) float32 (0/1 spikes)."""
    B, I, T = spike_input.shape
    assert weight.shape[0] == I
    O = weight.shape[1]

    unroll = 8
    B_pad = _round_up(B, 8)        # sublane-aligned per-step rows
    O_pad = _round_up(O, 128)      # lane-dense output / membrane / currents
    to = _choose_o_tile(O_pad)
    n_o = O_pad // to
    tt, T_pad = _choose_chunk(T, B_pad, I, to, unroll=unroll)
    n_chunks = T_pad // tt

    # Time-major slab; pad batch (sublane alignment) and time (whole chunks).
    # Padded batch rows are all-zero -> zero current -> never spike -> dropped.
    # The transpose + pad + bf16 cast fuse into a single XLA copy pass.
    x_tmaj = jnp.transpose(spike_input, (2, 0, 1))                 # (T, B, I)
    x_tmaj = jnp.pad(x_tmaj, ((0, T_pad - T), (0, B_pad - B), (0, 0)))
    x2d = x_tmaj.astype(jnp.bfloat16).reshape(T_pad * B_pad, I)    # (T_pad*B_pad, I)

    # Zero-padded output features get zero current -> membrane 0 -> no spikes.
    w_pad = jnp.pad(weight, ((0, 0), (0, O_pad - O))) if O_pad != O else weight

    est_vmem = (2 * tt * B_pad * I * 2          # x blocks (bf16, 2 buffers)
                + 2 * I * to * 4                # weight tile (2 buffers)
                + 2 * tt * B_pad * to * 4       # out blocks (2 buffers)
                + tt * B_pad * to * 4           # currents scratch
                + B_pad * to * 4)               # membrane
    vmem_limit = int(max(32 * 2**20, min(2 * est_vmem, 56 * 2**20),
                         est_vmem + 2 * 2**20))

    kernel = functools.partial(_lif_kernel, tt=tt, b=B_pad, unroll=unroll)

    out2d = pl.pallas_call(
        kernel,
        out_shape=jax.ShapeDtypeStruct((T_pad * B_pad, O_pad), jnp.float32),
        grid_spec=pltpu.PrefetchScalarGridSpec(
            num_scalar_prefetch=0,
            grid=(n_o, n_chunks),                       # O outer, time inner
            in_specs=[
                pl.BlockSpec((tt * B_pad, I), lambda o, c: (c, 0)),   # x chunk
                pl.BlockSpec((I, to), lambda o, c: (0, o)),           # W tile
            ],
            out_specs=pl.BlockSpec((tt * B_pad, to), lambda o, c: (c, o)),
            scratch_shapes=[
                pltpu.VMEM((tt * B_pad, to), jnp.float32),  # chunk currents
                pltpu.VMEM((B_pad, to), jnp.float32),       # membrane (carried)
            ],
        ),
        compiler_params=pltpu.CompilerParams(
            # O tiles are independent (parallel / megacore-shardable); the time
            # axis carries the membrane state -> sequential ("arbitrary").
            dimension_semantics=("parallel", "arbitrary"),
            vmem_limit_bytes=vmem_limit,
        ),
    )(x2d, w_pad)

    out = out2d.reshape(T_pad, B_pad, O_pad)[:T, :B, :O]    # (T, B, O)
    return jnp.transpose(out, (1, 2, 0))                     # (B, O, T)


def lif_reference(spike_input, weight):
    """Pure-JAX reference of the PyTorch forward loop."""
    B, I, T = spike_input.shape
    O = weight.shape[1]

    def step(membrane, x_t):
        current = x_t @ weight
        membrane = membrane + current
        fired = (membrane > THRESHOLD).astype(jnp.float32)
        membrane = membrane * (1.0 - fired) + RESET_VOLTAGE * fired
        return membrane, fired

    x_tmaj = jnp.transpose(spike_input, (2, 0, 1))  # (T, B, I)
    _, fired_tmaj = jax.lax.scan(step, jnp.zeros((B, O), jnp.float32), x_tmaj)
    return jnp.transpose(fired_tmaj, (1, 2, 0))


if __name__ == "__main__":
    key = jax.random.PRNGKey(0)

    def make_case(case_key, B, I, O, T):
        k_w, k_x = jax.random.split(case_key)
        # Weights quantized to multiples of 1/64 (exactly representable in
        # bf16/f32) so every membrane value is exact under any f32-matmul
        # decomposition -> spike decisions are bit-identical to the reference.
        w = jnp.round(jax.random.normal(k_w, (I, O), jnp.float32) * 0.1 * 64) / 64
        x = (jax.random.uniform(k_x, (B, I, T)) > 0.5).astype(jnp.float32)
        return x, w

    k1, k2 = jax.random.split(key)

    # Small case matching the module in spirit (single chunk, single O tile).
    x1, w1 = make_case(k1, B=2, I=4, O=32, T=8)
    out1 = jax.block_until_ready(lif_neuron_layer(x1, w1))
    ref1 = lif_reference(x1, w1)
    assert out1.shape == (2, 32, 8)
    assert jnp.array_equal(out1, ref1), "Pallas kernel mismatch vs reference (small)"

    # Larger case exercising batch/O padding, several time chunks, several O tiles.
    x2, w2 = make_case(k2, B=4, I=100, O=600, T=200)
    out2 = jax.block_until_ready(lif_neuron_layer(x2, w2))
    ref2 = lif_reference(x2, w2)
    assert out2.shape == (4, 600, 200)
    assert jnp.array_equal(out2, ref2), "Pallas kernel mismatch vs reference (large)"

    print("KERNEL_OK")
</pallas_src>

<mosaic_0001>
module attributes {stable_mosaic.version = 11 : i64} {
  func.func @_lif_kernel(%arg0: i32, %arg1: i32, %arg2: memref<64x4xbf16, #tpu.memory_space<vmem>>, %arg3: memref<4x128xf32, #tpu.memory_space<vmem>>, %arg4: memref<64x128xf32, #tpu.memory_space<vmem>>, %arg5: memref<64x128xf32, #tpu.memory_space<vmem>>, %arg6: memref<8x128xf32, #tpu.memory_space<vmem>>) attributes {dimension_semantics = [#tpu.dimension_semantics<parallel>, #tpu.dimension_semantics<arbitrary>], iteration_bounds = array<i64: 1, 1>, scalar_prefetch = 0 : i64, scratch_operands = 2 : i64, tpu.core_type = #tpu.core_type<tc>, window_params = [{transform_indices = @transform_0, window_bounds = array<i64: 64, 4>}, {transform_indices = @transform_1, window_bounds = array<i64: 4, 128>}, {transform_indices = @transform_2, window_bounds = array<i64: 64, 128>}]} {
    %c0_i32 = arith.constant 0 : i32
    %0 = arith.cmpi eq, %arg1, %c0_i32 : i32
    %1 = arith.extui %0 : i1 to i32
    %c0_i32_0 = arith.constant 0 : i32
    %2 = arith.cmpi ne, %1, %c0_i32_0 : i32
    scf.if %2 {
      %cst_44 = arith.constant 0.000000e+00 : f32
      %116 = vector.broadcast %cst_44 : f32 to vector<8x128xf32>
      %c0_45 = arith.constant 0 : index
      %c0_46 = arith.constant 0 : index
      %117 = vector.load %arg6[%c0_45, %c0_46] : memref<8x128xf32, #tpu.memory_space<vmem>>, vector<8x128xf32>
      tpu.vector_store %arg6[%c0_45, %c0_46], %116 {strides = array<i32>} : memref<8x128xf32, #tpu.memory_space<vmem>>, vector<8x128xf32>,
    } else {
    }
    %c0 = arith.constant 0 : index
    %c0_1 = arith.constant 0 : index
    %3 = vector.load %arg2[%c0, %c0_1] : memref<64x4xbf16, #tpu.memory_space<vmem>>, vector<64x4xbf16>
    %4 = arith.extf %3 : vector<64x4xbf16> to vector<64x4xf32>
    %c0_2 = arith.constant 0 : index
    %c0_3 = arith.constant 0 : index
    %5 = vector.load %arg3[%c0_2, %c0_3] : memref<4x128xf32, #tpu.memory_space<vmem>>, vector<4x128xf32>
    %cst = arith.constant dense<0.000000e+00> : vector<64x128xf32>
    %6 = tpu.matmul %4, %5, %cst {dimension_numbers = #tpu.dot_dimension_numbers<[1], [0], [0], [1], [0, 0, 1, 1], [], []>} : vector<64x4xf32>, vector<4x128xf32>, vector<64x128xf32> -> vector<64x128xf32>
    %c0_4 = arith.constant 0 : index
    %c0_5 = arith.constant 0 : index
    %7 = vector.load %arg5[%c0_4, %c0_5] : memref<64x128xf32, #tpu.memory_space<vmem>>, vector<64x128xf32>
    tpu.vector_store %arg5[%c0_4, %c0_5], %6 {strides = array<i32>} : memref<64x128xf32, #tpu.memory_space<vmem>>, vector<64x128xf32>,
    %c0_6 = arith.constant 0 : index
    %c0_7 = arith.constant 0 : index
    %8 = vector.load %arg6[%c0_6, %c0_7] : memref<8x128xf32, #tpu.memory_space<vmem>>, vector<8x128xf32>
    %c0_i32_8 = arith.constant 0 : i32
    %c64_i32 = arith.constant 64 : i32
    %9 = arith.muli %c0_i32_8, %c64_i32 : i32
    %10 = tpu.assume_multiple %9, 64 : i32
    %c0_i32_9 = arith.constant 0 : i32
    %11 = arith.addi %10, %c0_i32_9 : i32
    %12 = tpu.assume_multiple %11, 8 : i32
    %13 = arith.index_cast %12 : i32 to index
    %c0_10 = arith.constant 0 : index
    %14 = vector.load %arg5[%13, %c0_10] : memref<64x128xf32, #tpu.memory_space<vmem>>, vector<8x128xf32>
    %15 = arith.addf %8, %14 : vector<8x128xf32>
    %cst_11 = arith.constant 1.000000e+00 : f32
    %16 = vector.broadcast %cst_11 : f32 to vector<8x128xf32>
    %17 = arith.cmpf ogt, %15, %16 : vector<8x128xf32>
    %18 = arith.extui %17 : vector<8x128xi1> to vector<8x128xi32>
    %19 = arith.sitofp %18 : vector<8x128xi32> to vector<8x128xf32>
    %20 = arith.index_cast %12 : i32 to index
    %c0_12 = arith.constant 0 : index
    %21 = vector.load %arg4[%20, %c0_12] : memref<64x128xf32, #tpu.memory_space<vmem>>, vector<8x128xf32>
    tpu.vector_store %arg4[%20, %c0_12], %19 {strides = array<i32>} : memref<64x128xf32, #tpu.memory_space<vmem>>, vector<8x128xf32>,
    %cst_13 = arith.constant 0.000000e+00 : f32
    %22 = vector.broadcast %cst_13 : f32 to vector<8x128xf32>
    %23 = arith.select %17, %22, %15 : vector<8x128xi1>, vector<8x128xf32>
    %c8_i32 = arith.constant 8 : i32
    %24 = arith.addi %10, %c8_i32 : i32
    %25 = tpu.assume_multiple %24, 8 : i32
    %26 = arith.index_cast %25 : i32 to index
    %c0_14 = arith.constant 0 : index
    %27 = vector.load %arg5[%26, %c0_14] : memref<64x128xf32, #tpu.memory_space<vmem>>, vector<8x128xf32>
    %28 = arith.addf %23, %27 : vector<8x128xf32>
    %cst_15 = arith.constant 1.000000e+00 : f32
    %29 = vector.broadcast %cst_15 : f32 to vector<8x128xf32>
    %30 = arith.cmpf ogt, %28, %29 : vector<8x128xf32>
    %31 = arith.extui %30 : vector<8x128xi1> to vector<8x128xi32>
    %32 = arith.sitofp %31 : vector<8x128xi32> to vector<8x128xf32>
    %33 = arith.index_cast %25 : i32 to index
    %c0_16 = arith.constant 0 : index
    %34 = vector.load %arg4[%33, %c0_16] : memref<64x128xf32, #tpu.memory_space<vmem>>, vector<8x128xf32>
    tpu.vector_store %arg4[%33, %c0_16], %32 {strides = array<i32>} : memref<64x128xf32, #tpu.memory_space<vmem>>, vector<8x128xf32>,
    %cst_17 = arith.constant 0.000000e+00 : f32
    %35 = vector.broadcast %cst_17 : f32 to vector<8x128xf32>
    %36 = arith.select %30, %35, %28 : vector<8x128xi1>, vector<8x128xf32>
    %c16_i32 = arith.constant 16 : i32
    %37 = arith.addi %10, %c16_i32 : i32
    %38 = tpu.assume_multiple %37, 8 : i32
    %39 = arith.index_cast %38 : i32 to index
    %c0_18 = arith.constant 0 : index
    %40 = vector.load %arg5[%39, %c0_18] : memref<64x128xf32, #tpu.memory_space<vmem>>, vector<8x128xf32>
    %41 = arith.addf %36, %40 : vector<8x128xf32>
    %cst_19 = arith.constant 1.000000e+00 : f32
    %42 = vector.broadcast %cst_19 : f32 to vector<8x128xf32>
    %43 = arith.cmpf ogt, %41, %42 : vector<8x128xf32>
    %44 = arith.extui %43 : vector<8x128xi1> to vector<8x128xi32>
    %45 = arith.sitofp %44 : vector<8x128xi32> to vector<8x128xf32>
    %46 = arith.index_cast %38 : i32 to index
    %c0_20 = arith.constant 0 : index
    %47 = vector.load %arg4[%46, %c0_20] : memref<64x128xf32, #tpu.memory_space<vmem>>, vector<8x128xf32>
    tpu.vector_store %arg4[%46, %c0_20], %45 {strides = array<i32>} : memref<64x128xf32, #tpu.memory_space<vmem>>, vector<8x128xf32>,
    %cst_21 = arith.constant 0.000000e+00 : f32
    %48 = vector.broadcast %cst_21 : f32 to vector<8x128xf32>
    %49 = arith.select %43, %48, %41 : vector<8x128xi1>, vector<8x128xf32>
    %c24_i32 = arith.constant 24 : i32
    %50 = arith.addi %10, %c24_i32 : i32
    %51 = tpu.assume_multiple %50, 8 : i32
    %52 = arith.index_cast %51 : i32 to index
    %c0_22 = arith.constant 0 : index
    %53 = vector.load %arg5[%52, %c0_22] : memref<64x128xf32, #tpu.memory_space<vmem>>, vector<8x128xf32>
    %54 = arith.addf %49, %53 : vector<8x128xf32>
    %cst_23 = arith.constant 1.000000e+00 : f32
    %55 = vector.broadcast %cst_23 : f32 to vector<8x128xf32>
    %56 = arith.cmpf ogt, %54, %55 : vector<8x128xf32>
    %57 = arith.extui %56 : vector<8x128xi1> to vector<8x128xi32>
    %58 = arith.sitofp %57 : vector<8x128xi32> to vector<8x128xf32>
    %59 = arith.index_cast %51 : i32 to index
    %c0_24 = arith.constant 0 : index
    %60 = vector.load %arg4[%59, %c0_24] : memref<64x128xf32, #tpu.memory_space<vmem>>, vector<8x128xf32>
    tpu.vector_store %arg4[%59, %c0_24], %58 {strides = array<i32>} : memref<64x128xf32, #tpu.memory_space<vmem>>, vector<8x128xf32>,
    %cst_25 = arith.constant 0.000000e+00 : f32
    %61 = vector.broadcast %cst_25 : f32 to vector<8x128xf32>
    %62 = arith.select %56, %61, %54 : vector<8x128xi1>, vector<8x128xf32>
    %c32_i32 = arith.constant 32 : i32
    %63 = arith.addi %10, %c32_i32 : i32
    %64 = tpu.assume_multiple %63, 8 : i32
    %65 = arith.index_cast %64 : i32 to index
    %c0_26 = arith.constant 0 : index
    %66 = vector.load %arg5[%65, %c0_26] : memref<64x128xf32, #tpu.memory_space<vmem>>, vector<8x128xf32>
    %67 = arith.addf %62, %66 : vector<8x128xf32>
    %cst_27 = arith.constant 1.000000e+00 : f32
    %68 = vector.broadcast %cst_27 : f32 to vector<8x128xf32>
    %69 = arith.cmpf ogt, %67, %68 : vector<8x128xf32>
    %70 = arith.extui %69 : vector<8x128xi1> to vector<8x128xi32>
    %71 = arith.sitofp %70 : vector<8x128xi32> to vector<8x128xf32>
    %72 = arith.index_cast %64 : i32 to index
    %c0_28 = arith.constant 0 : index
    %73 = vector.load %arg4[%72, %c0_28] : memref<64x128xf32, #tpu.memory_space<vmem>>, vector<8x128xf32>
    tpu.vector_store %arg4[%72, %c0_28], %71 {strides = array<i32>} : memref<64x128xf32, #tpu.memory_space<vmem>>, vector<8x128xf32>,
    %cst_29 = arith.constant 0.000000e+00 : f32
    %74 = vector.broadcast %cst_29 : f32 to vector<8x128xf32>
    %75 = arith.select %69, %74, %67 : vector<8x128xi1>, vector<8x128xf32>
    %c40_i32 = arith.constant 40 : i32
    %76 = arith.addi %10, %c40_i32 : i32
    %77 = tpu.assume_multiple %76, 8 : i32
    %78 = arith.index_cast %77 : i32 to index
    %c0_30 = arith.constant 0 : index
    %79 = vector.load %arg5[%78, %c0_30] : memref<64x128xf32, #tpu.memory_space<vmem>>, vector<8x128xf32>
    %80 = arith.addf %75, %79 : vector<8x128xf32>
    %cst_31 = arith.constant 1.000000e+00 : f32
    %81 = vector.broadcast %cst_31 : f32 to vector<8x128xf32>
    %82 = arith.cmpf ogt, %80, %81 : vector<8x128xf32>
    %83 = arith.extui %82 : vector<8x128xi1> to vector<8x128xi32>
    %84 = arith.sitofp %83 : vector<8x128xi32> to vector<8x128xf32>
    %85 = arith.index_cast %77 : i32 to index
    %c0_32 = arith.constant 0 : index
    %86 = vector.load %arg4[%85, %c0_32] : memref<64x128xf32, #tpu.memory_space<vmem>>, vector<8x128xf32>
    tpu.vector_store %arg4[%85, %c0_32], %84 {strides = array<i32>} : memref<64x128xf32, #tpu.memory_space<vmem>>, vector<8x128xf32>,
    %cst_33 = arith.constant 0.000000e+00 : f32
    %87 = vector.broadcast %cst_33 : f32 to vector<8x128xf32>
    %88 = arith.select %82, %87, %80 : vector<8x128xi1>, vector<8x128xf32>
    %c48_i32 = arith.constant 48 : i32
    %89 = arith.addi %10, %c48_i32 : i32
    %90 = tpu.assume_multiple %89, 8 : i32
    %91 = arith.index_cast %90 : i32 to index
    %c0_34 = arith.constant 0 : index
    %92 = vector.load %arg5[%91, %c0_34] : memref<64x128xf32, #tpu.memory_space<vmem>>, vector<8x128xf32>
    %93 = arith.addf %88, %92 : vector<8x128xf32>
    %cst_35 = arith.constant 1.000000e+00 : f32
    %94 = vector.broadcast %cst_35 : f32 to vector<8x128xf32>
    %95 = arith.cmpf ogt, %93, %94 : vector<8x128xf32>
    %96 = arith.extui %95 : vector<8x128xi1> to vector<8x128xi32>
    %97 = arith.sitofp %96 : vector<8x128xi32> to vector<8x128xf32>
    %98 = arith.index_cast %90 : i32 to index
    %c0_36 = arith.constant 0 : index
    %99 = vector.load %arg4[%98, %c0_36] : memref<64x128xf32, #tpu.memory_space<vmem>>, vector<8x128xf32>
    tpu.vector_store %arg4[%98, %c0_36], %97 {strides = array<i32>} : memref<64x128xf32, #tpu.memory_space<vmem>>, vector<8x128xf32>,
    %cst_37 = arith.constant 0.000000e+00 : f32
    %100 = vector.broadcast %cst_37 : f32 to vector<8x128xf32>
    %101 = arith.select %95, %100, %93 : vector<8x128xi1>, vector<8x128xf32>
    %c56_i32 = arith.constant 56 : i32
    %102 = arith.addi %10, %c56_i32 : i32
    %103 = tpu.assume_multiple %102, 8 : i32
    %104 = arith.index_cast %103 : i32 to index
    %c0_38 = arith.constant 0 : index
    %105 = vector.load %arg5[%104, %c0_38] : memref<64x128xf32, #tpu.memory_space<vmem>>, vector<8x128xf32>
    %106 = arith.addf %101, %105 : vector<8x128xf32>
    %cst_39 = arith.constant 1.000000e+00 : f32
    %107 = vector.broadcast %cst_39 : f32 to vector<8x128xf32>
    %108 = arith.cmpf ogt, %106, %107 : vector<8x128xf32>
    %109 = arith.extui %108 : vector<8x128xi1> to vector<8x128xi32>
    %110 = arith.sitofp %109 : vector<8x128xi32> to vector<8x128xf32>
    %111 = arith.index_cast %103 : i32 to index
    %c0_40 = arith.constant 0 : index
    %112 = vector.load %arg4[%111, %c0_40] : memref<64x128xf32, #tpu.memory_space<vmem>>, vector<8x128xf32>
    tpu.vector_store %arg4[%111, %c0_40], %110 {strides = array<i32>} : memref<64x128xf32, #tpu.memory_space<vmem>>, vector<8x128xf32>,
    %cst_41 = arith.constant 0.000000e+00 : f32
    %113 = vector.broadcast %cst_41 : f32 to vector<8x128xf32>
    %114 = arith.select %108, %113, %106 : vector<8x128xi1>, vector<8x128xf32>
    %c1_i32 = arith.constant 1 : i32
    %c0_42 = arith.constant 0 : index
    %c0_43 = arith.constant 0 : index
    %115 = vector.load %arg6[%c0_42, %c0_43] : memref<8x128xf32, #tpu.memory_space<vmem>>, vector<8x128xf32>
    tpu.vector_store %arg6[%c0_42, %c0_43], %114 {strides = array<i32>} : memref<8x128xf32, #tpu.memory_space<vmem>>, vector<8x128xf32>,
    return
  }
  func.func @transform_0(%arg0: i32, %arg1: i32) -> (i32, i32) {
    %c0_i32 = arith.constant 0 : i32
    %c0_i32_0 = arith.constant 0 : i32
    return %arg1, %c0_i32 : i32, i32
  }
  func.func @transform_1(%arg0: i32, %arg1: i32) -> (i32, i32) {
    %c0_i32 = arith.constant 0 : i32
    %c0_i32_0 = arith.constant 0 : i32
    return %c0_i32, %arg0 : i32, i32
  }
  func.func @transform_2(%arg0: i32, %arg1: i32) -> (i32, i32) {
    %c0_i32 = arith.constant 0 : i32
    return %arg1, %arg0 : i32, i32
  }
}

</mosaic_0001>

<llo_original>
// kernel: tpu_custom_call.1
$region0: #{tpu_custom_call.1}
  #allocation0 [shape = 'u32[]', space=smem, size = 0x4, offset = 0x4, fixed_abs, tag = 'smem constant byte address 0x4 - core index']
  #allocation1 [shape = 'u32[144,128]{1,0:T(1,128)}', space=vmem, size = 0x12000, scoped, tag = 'internal scratch']
  #allocation2 [shape = 'f32[64,128]{1,0:T(8,128)}', space=vmem, size = 0x8000, scoped, tag = 'scratch operand']
  #allocation3 [shape = 'f32[8,128]{1,0:T(8,128)}', space=vmem, size = 0x1000, scoped, tag = 'scratch operand']
  %s0 = inlined_call_operand.vmem [shape: bf16[64,4], index: 0, kind: input, shape index: {}]
  %s1 = inlined_call_operand.vmem [shape: f32[4,128], index: 1, kind: input, shape index: {}]
  %s2 = inlined_call_operand.hbm [shape: f32[64,128], index: 2, kind: output, shape index: {}]
  %s3 = sld [smem:[#allocation0]]
  $region22: #{tpu_custom_call.1} parent=0
    _
  %s5 = ssub.s32 1, %s3
  %s6 = scalar_select 0, %s5, %s3
  $region1: #{tpu_custom_call.1} parent=0
    #allocation4 [shape = 'u8[32768]{0}', space=vmem, size = 0x8000, scoped, tag = 'output window, operand 0, single buffered']
    #allocation5 [shape = 's32[1]{0}', space=sflag, size = 0x4, scoped, tag = 'scoped memory for tpu_custom_call.1']
    %7 = vsyncpa [#allocation5], 0
    // Predicated region
    $region2: #{tpu_custom_call.1} parent=1 // pred_check
      _
    $region3: #{tpu_custom_call.1} parent=1 // pred_check_branch
      %9 = sbr.rel (0) target = $region5
    $region4: #{tpu_custom_call.1} parent=1 // pred_region
      _
    $region5: #{tpu_custom_call.1} parent=1 // pred_fallthru
      _
    // Predicated region
    $region6: #{tpu_custom_call.1} parent=1 // pred_check
      _
    $region7: #{tpu_custom_call.1} parent=1 // pred_check_branch
      %11 = sbr.rel (0) target = $region9
    $region8: #{tpu_custom_call.1} parent=1 // pred_region
      _
    $region9: #{tpu_custom_call.1} parent=1 // pred_fallthru
      _
    %p12 = scmp.eq.s32.totalorder 0, 0
    // Predicated region
    $region10: #{tpu_custom_call.1} parent=1 // pred_check
      %p13 = pneg %p12
    $region11: #{tpu_custom_call.1} parent=1 // pred_check_branch
      %15 = sbr.rel (%p13) target = $region13
    $region12: #{tpu_custom_call.1} parent=1 // pred_region
      %16 = vst [vmem:[#allocation3] sm:$0xff] 0.0
    $region13: #{tpu_custom_call.1} parent=1 // pred_fallthru
      _
    %v17 = vld [vmem:[%s0] sm:$0xf]
    %v18 = vld [vmem:[%s0 + $0x4] sm:$0xf]
    %v19 = vld [vmem:[%s0 + $0x8] sm:$0xf]
    %v20 = vld [vmem:[%s0 + $0xc] sm:$0xf]
    %v21 = vld [vmem:[%s0 + $0x10] sm:$0xf]
    %v22 = vld [vmem:[%s0 + $0x14] sm:$0xf]
    %v23 = vld [vmem:[%s0 + $0x18] sm:$0xf]
    %v24 = vld [vmem:[%s0 + $0x1c] sm:$0xf]
    %v25 = vunpack.c.l.bf16 %v17
    %v26 = vunpack.c.l.bf16 %v18
    %v27 = vunpack.c.l.bf16 %v19
    %v28 = vunpack.c.l.bf16 %v20
    %v29 = vunpack.c.l.bf16 %v21
    %v30 = vunpack.c.l.bf16 %v22
    %v31 = vunpack.c.l.bf16 %v23
    %v32 = vunpack.c.l.bf16 %v24
    %v33 = vld [vmem:[%s1] sm:$0xf]
    %vm34 = vcmask 31744
    %v36 = vsel %vm34, %v25, 0
    %v39 = vsel %vm34, %v26, 0
    %v42 = vsel %vm34, %v27, 0
    %v45 = vsel %vm34, %v28, 0
    %v48 = vsel %vm34, %v29, 0
    %v51 = vsel %vm34, %v30, 0
    %v54 = vsel %vm34, %v31, 0
    %v57 = vsel %vm34, %v32, 0
    %vm59 = vcmask 1043456
    %v61 = vsel %vm59, %v33, 0
    %63 = vmatprep.subr.mxu0 0.0
    %64 = vmatpush1.msra.mxu0 %v61
    %65 = vmatprep.subr.mxu0 0.0
    %66 = vmatpush1.msra.mxu0 0.0
    %67 = vmatprep.subr.mxu0 0.0
    %68 = vmatpush1.msra.mxu0 0.0
    %69 = vmatprep.subr.mxu0 0.0
    %70 = vmatpush1.msra.mxu0 0.0
    %71 = vmatprep.subr.mxu0 0.0
    %72 = vmatpush1.msra.mxu0 0.0
    %73 = vmatprep.subr.mxu0 0.0
    %74 = vmatpush1.msra.mxu0 0.0
    %75 = vmatprep.subr.mxu0 0.0
    %76 = vmatpush1.msra.mxu0 0.0
    %77 = vmatprep.subr.mxu0 0.0
    %78 = vmatpush1.msra.mxu0 0.0
    %79 = vmatprep.subr.mxu0 0.0
    %80 = vmatpush1.msra.mxu0 0.0
    %81 = vmatprep.subr.mxu0 0.0
    %82 = vmatpush1.msra.mxu0 0.0
    %83 = vmatprep.subr.mxu0 0.0
    %84 = vmatpush1.msra.mxu0 0.0
    %85 = vmatprep.subr.mxu0 0.0
    %86 = vmatpush1.msra.mxu0 0.0
    %87 = vmatprep.subr.mxu0 0.0
    %88 = vmatpush1.msra.mxu0 0.0
    %89 = vmatprep.subr.mxu0 0.0
    %90 = vmatpush1.msra.mxu0 0.0
    %91 = vmatprep.subr.mxu0 0.0
    %92 = vmatpush1.msra.mxu0 0.0
    %93 = vmatprep.subr.mxu0 0.0
    %94 = vmatpush1.msra.mxu0 0.0
    %95 = vmatprep.subr.mxu0 0.0
    %96 = vmatpush1.msra.mxu0 0.0
    %97 = vmatprep.subr.mxu0 0.0
    %98 = vmatpush1.msra.mxu0 0.0
    %99 = vmatprep.subr.mxu0 0.0
    %100 = vmatpush1.msra.mxu0 0.0
    %101 = vmatprep.subr.mxu0 0.0
    %102 = vmatpush1.msra.mxu0 0.0
    %103 = vmatprep.subr.mxu0 0.0
    %104 = vmatpush1.msra.mxu0 0.0
    %105 = vmatprep.subr.mxu0 0.0
    %106 = vmatpush1.msra.mxu0 0.0
    %107 = vmatprep.subr.mxu0 0.0
    %108 = vmatpush1.msra.mxu0 0.0
    %109 = vmatprep.subr.mxu0 0.0
    %110 = vmatpush1.msra.mxu0 0.0
    %111 = vmatprep.subr.mxu0 0.0
    %112 = vmatpush1.msra.mxu0 0.0
    %113 = vmatprep.subr.mxu0 0.0
    %114 = vmatpush1.msra.mxu0 0.0
    %115 = vmatprep.subr.mxu0 0.0
    %116 = vmatpush1.msra.mxu0 0.0
    %117 = vmatprep.subr.mxu0 0.0
    %118 = vmatpush1.msra.mxu0 0.0
    %119 = vmatprep.subr.mxu0 0.0
    %120 = vmatpush1.msra.mxu0 0.0
    %121 = vmatprep.subr.mxu0 0.0
    %122 = vmatpush1.msra.mxu0 0.0
    %123 = vmatprep.subr.mxu0 0.0
    %124 = vmatpush1.msra.mxu0 0.0
    %125 = vmatprep.subr.mxu0 0.0
    %126 = vmatpush1.msra.mxu0 0.0
    %127 = vmatprep.mubr.f32.mxu0 0.0
    %128 = vmatmul.mubr.f32.gmra.mrb[0].mxu0 %v36
    %v129 = vpop.f32.mrb[0].mxu0
    %v130 = vadd.f32 0.0, %v129
    %v131 = vpop.f32.mrb[0].mxu0
    %132 = vmatprep.mubr.f32.mxu0 0.0
    %133 = vmatmul.mubr.f32.gmra.mrb[0].mxu0 %v39
    %v134 = vpop.f32.mrb[0].mxu0
    %v135 = vadd.f32 0.0, %v134
    %v136 = vpop.f32.mrb[0].mxu0
    %137 = vmatprep.mubr.f32.mxu0 0.0
    %138 = vmatmul.mubr.f32.gmra.mrb[0].mxu0 %v42
    %v139 = vpop.f32.mrb[0].mxu0
    %v140 = vadd.f32 0.0, %v139
    %v141 = vpop.f32.mrb[0].mxu0
    %142 = vmatprep.mubr.f32.mxu0 0.0
    %143 = vmatmul.mubr.f32.gmra.mrb[0].mxu0 %v45
    %v144 = vpop.f32.mrb[0].mxu0
    %v145 = vadd.f32 0.0, %v144
    %v146 = vpop.f32.mrb[0].mxu0
    %147 = vmatprep.mubr.f32.mxu0 0.0
    %148 = vmatmul.mubr.f32.gmra.mrb[0].mxu0 %v48
    %v149 = vpop.f32.mrb[0].mxu0
    %v150 = vadd.f32 0.0, %v149
    %v151 = vpop.f32.mrb[0].mxu0
    %152 = vmatprep.mubr.f32.mxu0 0.0
    %153 = vmatmul.mubr.f32.gmra.mrb[0].mxu0 %v51
    %v154 = vpop.f32.mrb[0].mxu0
    %v155 = vadd.f32 0.0, %v154
    %v156 = vpop.f32.mrb[0].mxu0
    %157 = vmatprep.mubr.f32.mxu0 0.0
    %158 = vmatmul.mubr.f32.gmra.mrb[0].mxu0 %v54
    %v159 = vpop.f32.mrb[0].mxu0
    %v160 = vadd.f32 0.0, %v159
    %v161 = vpop.f32.mrb[0].mxu0
    %162 = vmatprep.mubr.f32.mxu0 0.0
    %163 = vmatmul.mubr.f32.gmra.mrb[0].mxu0 %v57
    %v164 = vpop.f32.mrb[0].mxu0
    %v165 = vadd.f32 0.0, %v164
    %v166 = vpop.f32.mrb[0].mxu0
    %167 = vdwg.mxu0
    %168 = vst [vmem:[#allocation2] sm:$0xff] %v130
    %169 = vst [vmem:[#allocation2 + $0x8] sm:$0xff] %v135
    %170 = vst [vmem:[#allocation2 + $0x10] sm:$0xff] %v140
    %171 = vst [vmem:[#allocation2 + $0x18] sm:$0xff] %v145
    %172 = vst [vmem:[#allocation2 + $0x20] sm:$0xff] %v150
    %173 = vst [vmem:[#allocation2 + $0x28] sm:$0xff] %v155
    %174 = vst [vmem:[#allocation2 + $0x30] sm:$0xff] %v160
    %175 = vst [vmem:[#allocation2 + $0x38] sm:$0xff] %v165
    %v176 = vld [vmem:[#allocation3] sm:$0xff]
    %v177 = vld [vmem:[#allocation2] sm:$0xff]
    %v178 = vadd.f32 %v176, %v177
    %vm179 = vcmp.gt.f32.partialorder %v178, 1.0
    %v180 = vsel %vm179, 1, 0
    %v181 = vcvt.s32.f32 %v180
    %182 = vst [vmem:[#allocation4] sm:$0xff] %v181
    %v183 = vsel %vm179, 0.0, %v178
    %s184 = sadd.s32 0, 8
    %s185 = scalar_lea.vmem [#allocation2], %s184
    %v186 = vld [vmem:[%s185] sm:$0xff]
    %v187 = vadd.f32 %v183, %v186
    %vm188 = vcmp.gt.f32.partialorder %v187, 1.0
    %v189 = vsel %vm188, 1, 0
    %v190 = vcvt.s32.f32 %v189
    %s191 = scalar_lea.vmem [#allocation4], %s184
    %192 = vst [vmem:[%s191] sm:$0xff] %v190
    %v193 = vsel %vm188, 0.0, %v187
    %s194 = sadd.s32 0, 16
    %s195 = scalar_lea.vmem [#allocation2], %s194
    %v196 = vld [vmem:[%s195] sm:$0xff]
    %v197 = vadd.f32 %v193, %v196
    %vm198 = vcmp.gt.f32.partialorder %v197, 1.0
    %v199 = vsel %vm198, 1, 0
    %v200 = vcvt.s32.f32 %v199
    %s201 = scalar_lea.vmem [#allocation4], %s194
    %202 = vst [vmem:[%s201] sm:$0xff] %v200
    %v203 = vsel %vm198, 0.0, %v197
    %s204 = sadd.s32 0, 24
    %s205 = scalar_lea.vmem [#allocation2], %s204
    %v206 = vld [vmem:[%s205] sm:$0xff]
    %v207 = vadd.f32 %v203, %v206
    %vm208 = vcmp.gt.f32.partialorder %v207, 1.0
    %v209 = vsel %vm208, 1, 0
    %v210 = vcvt.s32.f32 %v209
    %s211 = scalar_lea.vmem [#allocation4], %s204
    %212 = vst [vmem:[%s211] sm:$0xff] %v210
    %v213 = vsel %vm208, 0.0, %v207
    %s214 = sadd.s32 0, 32
    %s215 = scalar_lea.vmem [#allocation2], %s214
    %v216 = vld [vmem:[%s215] sm:$0xff]
    %v217 = vadd.f32 %v213, %v216
    %vm218 = vcmp.gt.f32.partialorder %v217, 1.0
    %v219 = vsel %vm218, 1, 0
    %v220 = vcvt.s32.f32 %v219
    %s221 = scalar_lea.vmem [#allocation4], %s214
    %222 = vst [vmem:[%s221] sm:$0xff] %v220
    %v223 = vsel %vm218, 0.0, %v217
    %s224 = sadd.s32 0, 40
    %s225 = scalar_lea.vmem [#allocation2], %s224
    %v226 = vld [vmem:[%s225] sm:$0xff]
    %v227 = vadd.f32 %v223, %v226
    %vm228 = vcmp.gt.f32.partialorder %v227, 1.0
    %v229 = vsel %vm228, 1, 0
    %v230 = vcvt.s32.f32 %v229
    %s231 = scalar_lea.vmem [#allocation4], %s224
    %232 = vst [vmem:[%s231] sm:$0xff] %v230
    %v233 = vsel %vm228, 0.0, %v227
    %s234 = sadd.s32 0, 48
    %s235 = scalar_lea.vmem [#allocation2], %s234
    %v236 = vld [vmem:[%s235] sm:$0xff]
    %v237 = vadd.f32 %v233, %v236
    %vm238 = vcmp.gt.f32.partialorder %v237, 1.0
    %v239 = vsel %vm238, 1, 0
    %v240 = vcvt.s32.f32 %v239
    %s241 = scalar_lea.vmem [#allocation4], %s234
    %242 = vst [vmem:[%s241] sm:$0xff] %v240
    %v243 = vsel %vm238, 0.0, %v237
    %s244 = sadd.s32 0, 56
    %s245 = scalar_lea.vmem [#allocation2], %s244
    %v246 = vld [vmem:[%s245] sm:$0xff]
    %v247 = vadd.f32 %v243, %v246
    %vm248 = vcmp.gt.f32.partialorder %v247, 1.0
    %v249 = vsel %vm248, 1, 0
    %v250 = vcvt.s32.f32 %v249
    %s251 = scalar_lea.vmem [#allocation4], %s244
    %252 = vst [vmem:[%s251] sm:$0xff] %v250
    %v253 = vsel %vm248, 0.0, %v247
    %254 = vst [vmem:[#allocation3] sm:$0xff] %v253
    // Predicated region
    $region14: #{tpu_custom_call.1} parent=1 // pred_check
      _
    $region15: #{tpu_custom_call.1} parent=1 // pred_check_branch
      %256 = sbr.rel (0) target = $region17
    $region16: #{tpu_custom_call.1} parent=1 // pred_region
      %s258 = ssub.s32 1024, 1024
      %259 = vsyncadd [#allocation5], %s258
      %s260 = sshll.u32 [#allocation4], 4
      %s261 = int_to_ptr.vmem [resolvable:$true] %s260
      %266 = dma.vmem_to_hbm [thread:$0]  %s261, 1024, %s2, [#allocation5], 128, 128, 8
    $region17: #{tpu_custom_call.1} parent=1 // pred_fallthru
      _
    // Predicated region
    $region18: #{tpu_custom_call.1} parent=1 // pred_check
      _
    $region19: #{tpu_custom_call.1} parent=1 // pred_check_branch
      %268 = sbr.rel (0) target = $region21
    $region20: #{tpu_custom_call.1} parent=1 // pred_region
      %269 = dma.done [#allocation5], 1024
    $region21: #{tpu_custom_call.1} parent=1 // pred_fallthru
      _
    %270 = vsyncpa [#allocation5], 1

</llo_original>
